<compile_context>
chip_gen: v7x
topology: tpu7x:2x2x1
jax: 0.10.0
libtpu: 0.0.40
codegen_flags: <defaults>
</compile_context>

<pallas_src>
import math

import jax
import jax.numpy as jnp
from jax.experimental import pallas as pl
from jax.experimental.pallas import tpu as pltpu

OBS_DIM = 5        # np.array([5]).prod()
ACT_DIM = 1        # np.prod([1])
HIDDEN = 256
PACKED_K = 8       # 5 obs + 1 act + 1 "ones" column (carries b1) + 1 zero pad
W3_ROWS = 8        # fc3 weight zero-padded to 8 rows (MXU min sublane tile)
LANE = 128


def _round_up(v, m):
    return (v + m - 1) // m * m


def _soft_q_kernel(xa_ref, w1_ref, w2_ref, b2_ref, w3_ref, o_ref):
    # xa_ref : [8, TB]        bf16  (rows: 5 obs, 1 act, 1 one, 1 zero; batch on lanes)
    # w1_ref : [1, 256, 8]    bf16  (b1 folded via the ones row)
    # w2_ref : [1, 256, 256]  bf16
    # b2_ref : [1, 256, 1]    f32
    # w3_ref : [1, 8, 256]    bf16  (row 0 is the real fc3 weight, rows 1..7 zero)
    # o_ref  : [1, 1, TB]     f32   (lane-dense Q-value row; fc3 bias added in wrapper)

    # fc1 + ReLU  (b1 arrives through the constant-1 input row -> no bias add)
    h1 = jnp.dot(w1_ref[0], xa_ref[...],
                 preferred_element_type=jnp.float32)            # [256, TB]
    h1 = jnp.maximum(h1, 0.0)

    # fc2 + bias + ReLU
    h2 = jnp.dot(w2_ref[0], h1.astype(jnp.bfloat16),
                 preferred_element_type=jnp.float32)            # [256, TB]
    h2 = jnp.maximum(h2 + b2_ref[0], 0.0)

    # fc3: [8, 256] @ [256, TB] -> [8, TB]; row 0 is the Q-value row.
    q = jnp.dot(w3_ref[0], h2.astype(jnp.bfloat16),
                preferred_element_type=jnp.float32)             # [8, TB]
    o_ref[...] = q[:1, :].reshape(o_ref.shape).astype(o_ref.dtype)


def _pack_inputs(x, a, bp):
    """Pack x [B,5] and a [B,1] into the transposed bf16 [8, bp] kernel operand."""
    B = x.shape[0]
    ones = jnp.ones((1, B), x.dtype)       # carries b1 through the fc1 matmul
    zeros = jnp.zeros((1, B), x.dtype)     # pads K from 6 to 8
    xaT = jnp.concatenate([x.T, a.T, ones, zeros], axis=0).astype(jnp.bfloat16)
    if bp > B:
        xaT = jnp.pad(xaT, ((0, 0), (0, bp - B)))
    return xaT


def soft_q_forward(x, a, params, *, block_b=2048):
    """x: [B,5] f32, a: [B,1] f32, params stacked over num_q critics.

    Returns Q-values of shape [num_q, B, 1] (num_q=1 reproduces the single
    SoftQNetwork forward as out[0])."""
    w1, w2, b2, w3, b3 = params
    num_q = w1.shape[0]
    B = x.shape[0]

    # Batch tile: multiple of 128 (lane axis), big enough to amortize per-step
    # overhead, capped so the grid has >= 2 steps when possible (v7x 2 TCs).
    block_b = max(LANE, block_b // LANE * LANE)
    bp_min = _round_up(B, LANE)
    tb = min(block_b, bp_min)
    if bp_min >= 2 * LANE:
        tb = min(tb, max(LANE, (bp_min // 2) // LANE * LANE))
    bp = _round_up(B, tb)
    nb = bp // tb

    xaT = _pack_inputs(x, a, bp)                                 # [8, bp] bf16

    cost = pl.CostEstimate(
        flops=2 * num_q * bp * (PACKED_K * HIDDEN + HIDDEN * HIDDEN
                                + HIDDEN * W3_ROWS),
        transcendentals=0,
        bytes_accessed=int(num_q * xaT.size * 2 + w1.size * 2 + w2.size * 2
                           + b2.size * 4 + w3.size * 2 + num_q * bp * 4),
    )

    out = pl.pallas_call(
        _soft_q_kernel,
        out_shape=jax.ShapeDtypeStruct((num_q, 1, bp), jnp.float32),
        grid=(num_q, nb),
        in_specs=[
            pl.BlockSpec((PACKED_K, tb), lambda q, j: (0, j)),          # xaT
            pl.BlockSpec((1, HIDDEN, PACKED_K), lambda q, j: (q, 0, 0)),  # w1
            pl.BlockSpec((1, HIDDEN, HIDDEN), lambda q, j: (q, 0, 0)),    # w2
            pl.BlockSpec((1, HIDDEN, 1), lambda q, j: (q, 0, 0)),         # b2
            pl.BlockSpec((1, W3_ROWS, HIDDEN), lambda q, j: (q, 0, 0)),   # w3
        ],
        out_specs=pl.BlockSpec((1, 1, tb), lambda q, j: (q, 0, j)),
        compiler_params=pltpu.CompilerParams(
            dimension_semantics=("parallel", "parallel")),
        cost_estimate=cost,
    )(xaT, w1, w2, b2, w3)

    # Lane-dense result -> [num_q, B, 1]; fold the fc3 bias here so it never
    # ships as a separate tiny kernel operand.
    return out[:, 0, :B, None] + b3


def init_params(key, num_q=1):
    """PyTorch nn.Linear default init, repacked for the kernel layout and
    stacked over num_q critics (Q1/Q2/target in one call)."""

    def single(k):
        ks = jax.random.split(k, 6)

        def linear(kw, kb, fan_in, fan_out):
            bound = 1.0 / math.sqrt(fan_in)
            w = jax.random.uniform(kw, (fan_out, fan_in), jnp.float32, -bound, bound)
            b = jax.random.uniform(kb, (fan_out,), jnp.float32, -bound, bound)
            return w, b

        W1, b1v = linear(ks[0], ks[1], OBS_DIM + ACT_DIM, HIDDEN)   # [256,6],[256]
        W2, b2v = linear(ks[2], ks[3], HIDDEN, HIDDEN)              # [256,256],[256]
        W3, b3v = linear(ks[4], ks[5], HIDDEN, 1)                   # [1,256],[1]

        w1k = jnp.concatenate(
            [W1, b1v[:, None], jnp.zeros((HIDDEN, 1), jnp.float32)],
            axis=1).astype(jnp.bfloat16)                            # [256, 8]
        w2k = W2.astype(jnp.bfloat16)                               # [256, 256]
        b2k = b2v[:, None]                                          # [256, 1] f32
        w3k = jnp.pad(W3, ((0, W3_ROWS - 1), (0, 0))).astype(jnp.bfloat16)  # [8,256]
        b3k = b3v[:, None]                                          # [1, 1] f32
        return w1k, w2k, b2k, w3k, b3k

    parts = [single(k) for k in jax.random.split(key, num_q)]
    return tuple(jnp.stack([p[i] for p in parts], axis=0) for i in range(5))


def reference_forward(x, a, params):
    """Plain-JAX reference with numerics identical to the kernel."""
    w1, w2, b2, w3, b3 = params
    B = x.shape[0]
    xaT = jnp.concatenate(
        [x.T, a.T, jnp.ones((1, B), x.dtype), jnp.zeros((1, B), x.dtype)],
        axis=0).astype(jnp.bfloat16)                                # [8, B]
    outs = []
    for qi in range(w1.shape[0]):
        h1 = jnp.maximum(
            jnp.dot(w1[qi], xaT, preferred_element_type=jnp.float32), 0.0)
        h2 = jnp.maximum(
            jnp.dot(w2[qi], h1.astype(jnp.bfloat16),
                    preferred_element_type=jnp.float32) + b2[qi], 0.0)
        qrow = jnp.dot(w3[qi], h2.astype(jnp.bfloat16),
                       preferred_element_type=jnp.float32)[:1]       # [1, B]
        outs.append(qrow.T + b3[qi])                                  # [B, 1]
    return jnp.stack(outs, axis=0)


if __name__ == "__main__":
    key = jax.random.PRNGKey(0)
    k_params, k_x, k_a = jax.random.split(key, 3)

    num_q = 2                                   # twin critics in one call
    params = init_params(k_params, num_q=num_q)

    B = 8
    x = jax.random.normal(k_x, (B, OBS_DIM), jnp.float32)
    a = jax.random.normal(k_a, (B, ACT_DIM), jnp.float32)

    out = soft_q_forward(x, a, params)          # [num_q, B, 1]
    jax.block_until_ready(out)

    ref = reference_forward(x, a, params)
    assert out.shape == (num_q, B, 1)
    assert jnp.allclose(out, ref, atol=1e-3, rtol=1e-3), \
        float(jnp.max(jnp.abs(out - ref)))

    # Single-module (original SoftQNetwork) semantics: critic 0's [B, 1] output.
    q1 = out[0]
    assert q1.shape == (B, 1)

    # NOTE: obs/act/bias go through bf16 before the MXU, so results differ from
    # a float32 PyTorch SoftQNetwork at the ~1e-3 level (acceptable for SAC).
    print("KERNEL_OK")
</pallas_src>

<mosaic_0001>
module attributes {stable_mosaic.version = 11 : i64} {
  func.func @_soft_q_kernel(%arg0: i32, %arg1: i32, %arg2: memref<8x128xbf16, #tpu.memory_space<vmem>>, %arg3: memref<1x256x8xbf16, #tpu.memory_space<vmem>>, %arg4: memref<1x256x256xbf16, #tpu.memory_space<vmem>>, %arg5: memref<1x256x1xf32, #tpu.memory_space<vmem>>, %arg6: memref<1x8x256xbf16, #tpu.memory_space<vmem>>, %arg7: memref<1x1x128xf32, #tpu.memory_space<vmem>>) attributes {dimension_semantics = [#tpu.dimension_semantics<parallel>, #tpu.dimension_semantics<parallel>], iteration_bounds = array<i64: 2, 1>, scalar_prefetch = 0 : i64, scratch_operands = 0 : i64, tpu.core_type = #tpu.core_type<tc>, window_params = [{transform_indices = @transform_0, window_bounds = array<i64: 8, 128>}, {transform_indices = @transform_1, window_bounds = array<i64: 1, 256, 8>}, {transform_indices = @transform_2, window_bounds = array<i64: 1, 256, 256>}, {transform_indices = @transform_3, window_bounds = array<i64: 1, 256, 1>}, {transform_indices = @transform_4, window_bounds = array<i64: 1, 8, 256>}, {transform_indices = @transform_5, window_bounds = array<i64: 1, 1, 128>}]} {
    %c0 = arith.constant 0 : index
    %c0_0 = arith.constant 0 : index
    %c0_1 = arith.constant 0 : index
    %0 = vector.load %arg3[%c0, %c0_0, %c0_1] : memref<1x256x8xbf16, #tpu.memory_space<vmem>>, vector<1x256x8xbf16>
    %1 = vector.shape_cast %0 : vector<1x256x8xbf16> to vector<256x8xbf16>
    %c0_2 = arith.constant 0 : index
    %c0_3 = arith.constant 0 : index
    %2 = vector.load %arg2[%c0_2, %c0_3] : memref<8x128xbf16, #tpu.memory_space<vmem>>, vector<8x128xbf16>
    %cst = arith.constant dense<0.000000e+00> : vector<256x128xf32>
    %3 = tpu.matmul %1, %2, %cst {dimension_numbers = #tpu.dot_dimension_numbers<[1], [0], [0], [1], [0, 0, 1, 1], [], []>} : vector<256x8xbf16>, vector<8x128xbf16>, vector<256x128xf32> -> vector<256x128xf32>
    %cst_4 = arith.constant 0.000000e+00 : f32
    %4 = vector.broadcast %cst_4 : f32 to vector<256x128xf32>
    %5 = arith.maximumf %3, %4 : vector<256x128xf32>
    %c0_5 = arith.constant 0 : index
    %c0_6 = arith.constant 0 : index
    %c0_7 = arith.constant 0 : index
    %6 = vector.load %arg4[%c0_5, %c0_6, %c0_7] : memref<1x256x256xbf16, #tpu.memory_space<vmem>>, vector<1x256x256xbf16>
    %7 = vector.shape_cast %6 : vector<1x256x256xbf16> to vector<256x256xbf16>
    %8 = arith.truncf %5 : vector<256x128xf32> to vector<256x128xbf16>
    %cst_8 = arith.constant dense<0.000000e+00> : vector<256x128xf32>
    %9 = tpu.matmul %7, %8, %cst_8 {dimension_numbers = #tpu.dot_dimension_numbers<[1], [0], [0], [1], [0, 0, 1, 1], [], []>} : vector<256x256xbf16>, vector<256x128xbf16>, vector<256x128xf32> -> vector<256x128xf32>
    %c0_9 = arith.constant 0 : index
    %c0_10 = arith.constant 0 : index
    %c0_11 = arith.constant 0 : index
    %10 = vector.load %arg5[%c0_9, %c0_10, %c0_11] : memref<1x256x1xf32, #tpu.memory_space<vmem>>, vector<1x256x1xf32>
    %11 = vector.shape_cast %10 : vector<1x256x1xf32> to vector<256x1xf32>
    %12 = vector.broadcast %11 : vector<256x1xf32> to vector<256x128xf32>
    %13 = arith.addf %9, %12 : vector<256x128xf32>
    %cst_12 = arith.constant 0.000000e+00 : f32
    %14 = vector.broadcast %cst_12 : f32 to vector<256x128xf32>
    %15 = arith.maximumf %13, %14 : vector<256x128xf32>
    %c0_13 = arith.constant 0 : index
    %c0_14 = arith.constant 0 : index
    %c0_15 = arith.constant 0 : index
    %16 = vector.load %arg6[%c0_13, %c0_14, %c0_15] : memref<1x8x256xbf16, #tpu.memory_space<vmem>>, vector<1x8x256xbf16>
    %17 = vector.shape_cast %16 : vector<1x8x256xbf16> to vector<8x256xbf16>
    %18 = arith.truncf %15 : vector<256x128xf32> to vector<256x128xbf16>
    %cst_16 = arith.constant dense<0.000000e+00> : vector<8x128xf32>
    %19 = tpu.matmul %17, %18, %cst_16 {dimension_numbers = #tpu.dot_dimension_numbers<[1], [0], [0], [1], [0, 0, 1, 1], [], []>} : vector<8x256xbf16>, vector<256x128xbf16>, vector<8x128xf32> -> vector<8x128xf32>
    %20 = vector.extract_strided_slice %19 {offsets = [0, 0], sizes = [1, 128], strides = [1, 1]} : vector<8x128xf32> to vector<1x128xf32>
    %21 = vector.shape_cast %20 : vector<1x128xf32> to vector<1x1x128xf32>
    %c0_17 = arith.constant 0 : index
    %c0_18 = arith.constant 0 : index
    %c0_19 = arith.constant 0 : index
    %22 = vector.load %arg7[%c0_17, %c0_18, %c0_19] : memref<1x1x128xf32, #tpu.memory_space<vmem>>, vector<1x1x128xf32>
    tpu.vector_store %arg7[%c0_17, %c0_18, %c0_19], %21 {strides = array<i32>} : memref<1x1x128xf32, #tpu.memory_space<vmem>>, vector<1x1x128xf32>,
    return
  }
  func.func @transform_0(%arg0: i32, %arg1: i32) -> (i32, i32) {
    %c0_i32 = arith.constant 0 : i32
    %c0_i32_0 = arith.constant 0 : i32
    return %c0_i32, %arg1 : i32, i32
  }
  func.func @transform_1(%arg0: i32, %arg1: i32) -> (i32, i32, i32) {
    %c0_i32 = arith.constant 0 : i32
    %c0_i32_0 = arith.constant 0 : i32
    %c0_i32_1 = arith.constant 0 : i32
    return %arg0, %c0_i32, %c0_i32_0 : i32, i32, i32
  }
  func.func @transform_2(%arg0: i32, %arg1: i32) -> (i32, i32, i32) {
    %c0_i32 = arith.constant 0 : i32
    %c0_i32_0 = arith.constant 0 : i32
    %c0_i32_1 = arith.constant 0 : i32
    return %arg0, %c0_i32, %c0_i32_0 : i32, i32, i32
  }
  func.func @transform_3(%arg0: i32, %arg1: i32) -> (i32, i32, i32) {
    %c0_i32 = arith.constant 0 : i32
    %c0_i32_0 = arith.constant 0 : i32
    %c0_i32_1 = arith.constant 0 : i32
    return %arg0, %c0_i32, %c0_i32_0 : i32, i32, i32
  }
  func.func @transform_4(%arg0: i32, %arg1: i32) -> (i32, i32, i32) {
    %c0_i32 = arith.constant 0 : i32
    %c0_i32_0 = arith.constant 0 : i32
    %c0_i32_1 = arith.constant 0 : i32
    return %arg0, %c0_i32, %c0_i32_0 : i32, i32, i32
  }
  func.func @transform_5(%arg0: i32, %arg1: i32) -> (i32, i32, i32) {
    %c0_i32 = arith.constant 0 : i32
    %c0_i32_0 = arith.constant 0 : i32
    return %arg0, %c0_i32, %arg1 : i32, i32, i32
  }
}

</mosaic_0001>

<llo_original>
// kernel: tpu_custom_call.1
$region0: #{tpu_custom_call.1}
  #allocation0 [shape = 'u32[]', space=smem, size = 0x4, offset = 0x4, fixed_abs, tag = 'smem constant byte address 0x4 - core index']
  #allocation1 [shape = 'u32[144,128]{1,0:T(1,128)}', space=vmem, size = 0x12000, scoped, tag = 'internal scratch']
  %s0 = inlined_call_operand.vmem [shape: bf16[8,128], index: 0, kind: input, shape index: {}]
  %s1 = inlined_call_operand.vmem [shape: bf16[2,256,8], index: 1, kind: input, shape index: {}]
  %s2 = inlined_call_operand.vmem [shape: bf16[2,256,256], index: 2, kind: input, shape index: {}]
  %s3 = inlined_call_operand.vmem [shape: f32[2,256,1], index: 3, kind: input, shape index: {}]
  %s4 = inlined_call_operand.vmem [shape: bf16[2,8,256], index: 4, kind: input, shape index: {}]
  %s5 = inlined_call_operand.hbm [shape: f32[2,1,128], index: 5, kind: output, shape index: {}]
  %s6 = sld [smem:[#allocation0]]
  $region53: #{tpu_custom_call.1} parent=0
    _
  %s8 = ssub.s32 1, %s6
  %s9 = scalar_select 0, %s8, %s6
  $region1: #{tpu_custom_call.1} parent=0
    #allocation2 [shape = 'u8[1024]{0}', space=vmem, size = 0x400, scoped, tag = 'output window, operand 0']
    #allocation3 [shape = 's32[2]{0}', space=sflag, size = 0x8, scoped, tag = 'scoped memory for tpu_custom_call.1']
    %10 = vsyncpa [#allocation3], 0
    %s11 = scalar_lea.sflag [#allocation3], 1
    %12 = vsyncpa %s11, 0
    loop: start=0, step=1, limit=4
    $region2: #{tpu_custom_call.1} parent=1 // loop_pre_header
      _
    $region3: #{tpu_custom_call.1} parent=1 // loop_header
      %s14 = sphi 0, %s18
      %p15 = scmp.ge.s32.totalorder %s14, 4
      %s21 = sphi 0, %s33
      %s22 = sphi 0, %s29
      %s23 = sphi 0, %s21
      %s24 = sphi 0, %s22
      %s25 = sphi 0, %s23
      %s26 = sphi 0, %s24
      %s36 = sphi 0, %s38
      %s39 = sphi 0, %s36
      %s40 = sphi 0, %s39
      %s56 = sphi 0, %s40
      %s62 = sphi 0, %s64
      %s65 = sphi 0, %s62
      %s66 = sphi 0, %s65
      %s82 = sphi 0, %s66
      %s88 = sphi 0, %s90
      %s91 = sphi 0, %s88
      %s92 = sphi 0, %s91
      %s108 = sphi 0, %s92
      %s114 = sphi 0, %s116
      %s117 = sphi 0, %s114
      %s118 = sphi 0, %s117
      %s134 = sphi 0, %s118
      %s140 = sphi 0, %s142
      %s143 = sphi 0, %s140
      %s144 = sphi 0, %s143
      %s160 = sphi 0, %s144
      %s168 = sphi 0, %s170
      %s171 = sphi 0, %s168
      %s172 = sphi 0, %s171
      %s188 = sphi 0, %s172
    $region4: #{tpu_custom_call.1} parent=1 // loop_header_branch
      %17 = sbr.rel (%p15) target = $region8
    $region5: #{tpu_custom_call.1} parent=1 // loop_body
      %s19 = ssub.s32 %s14, 1
      %s20 = ssub.s32 %s14, 2
      %s27 = sadd.s32 1, %s22
      %p28 = scmp.ge.s32.totalorder %s27, 1
      %s29 = scalar_select %p28, 0, %s27
      %s30 = sadd.s32 1, %s21
      %s31 = scalar_select %p28, %s30, %s21
      %p32 = scmp.ge.s32.totalorder %s31, 2
      %s33 = scalar_select %p32, 0, %s31
      %s34 = ssub.s32 %s22, %s29
      %p35 = scmp.eq.s32.totalorder %s34, 0
      %s37 = sadd.s32 %s36, 1
      %s38 = scalar_select %p35, %s36, %s37
      %p41 = pneg %p35
      %p42 = scmp.eq.s32.totalorder %s14, 1
      %p43 = por %p41, %p42
      %p44 = scmp.ne.s32.totalorder %s36, %s39
      %p45 = scmp.eq.s32.totalorder %s14, 0
      %p46 = por %p44, %p45
      %p47 = scmp.ne.s32.totalorder %s36, %s39
      %p48 = scmp.eq.s32.totalorder %s19, 1
      %p49 = por %p47, %p48
      %p50 = scmp.ne.s32.totalorder %s39, %s40
      %p51 = scmp.eq.s32.totalorder %s19, 0
      %p52 = por %p50, %p51
      %p53 = scmp.ne.s32.totalorder %s39, %s40
      %p54 = scmp.eq.s32.totalorder %s20, 1
      %p55 = por %p53, %p54
      %p57 = scmp.ne.s32.totalorder %s40, %s56
      %p58 = scmp.eq.s32.totalorder %s20, 0
      %p59 = por %p57, %p58
      %s60 = ssub.s32 %s21, %s33
      %p61 = scmp.eq.s32.totalorder %s60, 0
      %s63 = sadd.s32 %s62, 1
      %s64 = scalar_select %p61, %s62, %s63
      %p67 = pneg %p61
      %p68 = scmp.eq.s32.totalorder %s14, 1
      %p69 = por %p67, %p68
      %p70 = scmp.ne.s32.totalorder %s62, %s65
      %p71 = scmp.eq.s32.totalorder %s14, 0
      %p72 = por %p70, %p71
      %p73 = scmp.ne.s32.totalorder %s62, %s65
      %p74 = scmp.eq.s32.totalorder %s19, 1
      %p75 = por %p73, %p74
      %p76 = scmp.ne.s32.totalorder %s65, %s66
      %p77 = scmp.eq.s32.totalorder %s19, 0
      %p78 = por %p76, %p77
      %p79 = scmp.ne.s32.totalorder %s65, %s66
      %p80 = scmp.eq.s32.totalorder %s20, 1
      %p81 = por %p79, %p80
      %p83 = scmp.ne.s32.totalorder %s66, %s82
      %p84 = scmp.eq.s32.totalorder %s20, 0
      %p85 = por %p83, %p84
      %s86 = ssub.s32 %s21, %s33
      %p87 = scmp.eq.s32.totalorder %s86, 0
      %s89 = sadd.s32 %s88, 1
      %s90 = scalar_select %p87, %s88, %s89
      %p93 = pneg %p87
      %p94 = scmp.eq.s32.totalorder %s14, 1
      %p95 = por %p93, %p94
      %p96 = scmp.ne.s32.totalorder %s88, %s91
      %p97 = scmp.eq.s32.totalorder %s14, 0
      %p98 = por %p96, %p97
      %p99 = scmp.ne.s32.totalorder %s88, %s91
      %p100 = scmp.eq.s32.totalorder %s19, 1
      %p101 = por %p99, %p100
      %p102 = scmp.ne.s32.totalorder %s91, %s92
      %p103 = scmp.eq.s32.totalorder %s19, 0
      %p104 = por %p102, %p103
      %p105 = scmp.ne.s32.totalorder %s91, %s92
      %p106 = scmp.eq.s32.totalorder %s20, 1
      %p107 = por %p105, %p106
      %p109 = scmp.ne.s32.totalorder %s92, %s108
      %p110 = scmp.eq.s32.totalorder %s20, 0
      %p111 = por %p109, %p110
      %s112 = ssub.s32 %s21, %s33
      %p113 = scmp.eq.s32.totalorder %s112, 0
      %s115 = sadd.s32 %s114, 1
      %s116 = scalar_select %p113, %s114, %s115
      %p119 = pneg %p113
      %p120 = scmp.eq.s32.totalorder %s14, 1
      %p121 = por %p119, %p120
      %p122 = scmp.ne.s32.totalorder %s114, %s117
      %p123 = scmp.eq.s32.totalorder %s14, 0
      %p124 = por %p122, %p123
      %p125 = scmp.ne.s32.totalorder %s114, %s117
      %p126 = scmp.eq.s32.totalorder %s19, 1
      %p127 = por %p125, %p126
      %p128 = scmp.ne.s32.totalorder %s117, %s118
      %p129 = scmp.eq.s32.totalorder %s19, 0
      %p130 = por %p128, %p129
      %p131 = scmp.ne.s32.totalorder %s117, %s118
      %p132 = scmp.eq.s32.totalorder %s20, 1
      %p133 = por %p131, %p132
      %p135 = scmp.ne.s32.totalorder %s118, %s134
      %p136 = scmp.eq.s32.totalorder %s20, 0
      %p137 = por %p135, %p136
      %s138 = ssub.s32 %s21, %s33
      %p139 = scmp.eq.s32.totalorder %s138, 0
      %s141 = sadd.s32 %s140, 1
      %s142 = scalar_select %p139, %s140, %s141
      %p145 = pneg %p139
      %p146 = scmp.eq.s32.totalorder %s14, 1
      %p147 = por %p145, %p146
      %p148 = scmp.ne.s32.totalorder %s140, %s143
      %p149 = scmp.eq.s32.totalorder %s14, 0
      %p150 = por %p148, %p149
      %p151 = scmp.ne.s32.totalorder %s140, %s143
      %p152 = scmp.eq.s32.totalorder %s19, 1
      %p153 = por %p151, %p152
      %p154 = scmp.ne.s32.totalorder %s143, %s144
      %p155 = scmp.eq.s32.totalorder %s19, 0
      %p156 = por %p154, %p155
      %p157 = scmp.ne.s32.totalorder %s143, %s144
      %p158 = scmp.eq.s32.totalorder %s20, 1
      %p159 = por %p157, %p158
      %p161 = scmp.ne.s32.totalorder %s144, %s160
      %p162 = scmp.eq.s32.totalorder %s20, 0
      %p163 = por %p161, %p162
      %s164 = ssub.s32 %s21, %s33
      %s165 = ssub.s32 %s22, %s29
      %s166 = sor.u32 %s164, %s165
      %p167 = scmp.eq.s32.totalorder %s166, 0
      %s169 = sadd.s32 %s168, 1
      %s170 = scalar_select %p167, %s168, %s169
      %p173 = pneg %p167
      %p174 = scmp.eq.s32.totalorder %s14, 1
      %p175 = por %p173, %p174
      %p176 = scmp.ne.s32.totalorder %s168, %s171
      %p177 = scmp.eq.s32.totalorder %s14, 0
      %p178 = por %p176, %p177
      %p179 = scmp.ne.s32.totalorder %s168, %s171
      %p180 = scmp.eq.s32.totalorder %s19, 1
      %p181 = por %p179, %p180
      %p182 = scmp.ne.s32.totalorder %s171, %s172
      %p183 = scmp.eq.s32.totalorder %s19, 0
      %p184 = por %p182, %p183
      %p185 = scmp.ne.s32.totalorder %s171, %s172
      %p186 = scmp.eq.s32.totalorder %s20, 1
      %p187 = por %p185, %p186
      %p189 = scmp.ne.s32.totalorder %s172, %s188
      %p190 = scmp.eq.s32.totalorder %s20, 0
      %p191 = por %p189, %p190
      %p192 = scmp.le.s32.totalorder 1, %s14
      %p193 = scmp.lt.s32.totalorder %s14, 3
      %p194 = pnand %p192, %p193
      %p195 = pneg %p194
      // Predicated region
      $region9: #{tpu_custom_call.1} parent=5 // pred_check
        _
      $region10: #{tpu_custom_call.1} parent=5 // pred_check_branch
        %197 = sbr.rel (%p194) target = $region12
      $region11: #{tpu_custom_call.1} parent=5 // pred_region
        %s198 = ssub.s32 %s14, 1
        // Predicated region
        $region13: #{tpu_custom_call.1} parent=11 // pred_check
          %p199 = pneg %p52
        $region14: #{tpu_custom_call.1} parent=11 // pred_check_branch
          %201 = sbr.rel (%p199) target = $region16
        $region15: #{tpu_custom_call.1} parent=11 // pred_region
          %p202 = scmp.lt.s32.totalorder %s24, 0
          %s203 = scalar_select %p202, %s24, 0
          %s204 = smul.addr %s203, 4
          %s205 = scalar_lea.vmem %s0, %s204
        $region16: #{tpu_custom_call.1} parent=11 // pred_fallthru
          _
      $region12: #{tpu_custom_call.1} parent=5 // pred_fallthru
        _
      %p206 = scmp.lt.s32.totalorder %s14, 2
      // Predicated region
      $region17: #{tpu_custom_call.1} parent=5 // pred_check
        %p207 = pneg %p206
      $region18: #{tpu_custom_call.1} parent=5 // pred_check_branch
        %209 = sbr.rel (%p207) target = $region20
      $region19: #{tpu_custom_call.1} parent=5 // pred_region
        // Predicated region
        $region21: #{tpu_custom_call.1} parent=19 // pred_check
          %p210 = pneg %p72
        $region22: #{tpu_custom_call.1} parent=19 // pred_check_branch
          %212 = sbr.rel (%p210) target = $region24
        $region23: #{tpu_custom_call.1} parent=19 // pred_region
          %p213 = scmp.lt.s32.totalorder %s21, 1
          %s214 = scalar_select %p213, %s21, 1
          %s215 = smul.addr %s214, 32
          %s216 = smul.addr %s215, 4
          %s217 = scalar_lea.vmem %s1, %s216
        $region24: #{tpu_custom_call.1} parent=19 // pred_fallthru
          _
        // Predicated region
        $region25: #{tpu_custom_call.1} parent=19 // pred_check
          %p218 = pneg %p98
        $region26: #{tpu_custom_call.1} parent=19 // pred_check_branch
          %220 = sbr.rel (%p218) target = $region28
        $region27: #{tpu_custom_call.1} parent=19 // pred_region
          %p221 = scmp.lt.s32.totalorder %s21, 1
          %s222 = scalar_select %p221, %s21, 1
          %s223 = smul.addr %s222, 64
          %s224 = smul.addr %s223, 4
          %s225 = scalar_lea.vmem %s2, %s224
        $region28: #{tpu_custom_call.1} parent=19 // pred_fallthru
          _
        // Predicated region
        $region29: #{tpu_custom_call.1} parent=19 // pred_check
          %p226 = pneg %p124
        $region30: #{tpu_custom_call.1} parent=19 // pred_check_branch
          %228 = sbr.rel (%p226) target = $region32
        $region31: #{tpu_custom_call.1} parent=19 // pred_region
          %p229 = scmp.lt.s32.totalorder %s21, 1
          %s230 = scalar_select %p229, %s21, 1
          %s231 = smul.addr %s230, 32
          %s232 = smul.addr %s231, 8
          %s233 = scalar_lea.vmem %s3, %s232
        $region32: #{tpu_custom_call.1} parent=19 // pred_fallthru
          _
        // Predicated region
        $region33: #{tpu_custom_call.1} parent=19 // pred_check
          %p234 = pneg %p150
        $region34: #{tpu_custom_call.1} parent=19 // pred_check_branch
          %236 = sbr.rel (%p234) target = $region36
        $region35: #{tpu_custom_call.1} parent=19 // pred_region
          %p237 = scmp.lt.s32.totalorder %s21, 1
          %s238 = scalar_select %p237, %s21, 1
          %s239 = smul.addr %s238, 2
          %s240 = smul.addr %s239, 4
          %s241 = scalar_lea.vmem %s4, %s240
        $region36: #{tpu_custom_call.1} parent=19 // pred_fallthru
          _
      $region20: #{tpu_custom_call.1} parent=5 // pred_fallthru
        _
      %p242 = scmp.le.s32.totalorder 1, %s14
      %p243 = scmp.lt.s32.totalorder %s14, 3
      %p244 = pnand %p242, %p243
      %p245 = pneg %p244
      // Predicated region
      $region37: #{tpu_custom_call.1} parent=5 // pred_check
        _
      $region38: #{tpu_custom_call.1} parent=5 // pred_check_branch
        %247 = sbr.rel (%p244) target = $region40
      $region39: #{tpu_custom_call.1} parent=5 // pred_region
        %s248 = ssub.s32 %s14, 1
        %p249 = scmp.lt.s32.totalorder %s24, 0
        %s250 = scalar_select %p249, %s24, 0
        %s251 = smul.addr %s250, 4
        %s252 = scalar_lea.vmem %s0, %s251
        %p253 = pneg %p52
        %p254 = pneg %p49
        %p255 = scmp.lt.s32.totalorder %s23, 1
        %s256 = scalar_select %p255, %s23, 1
        %s257 = smul.addr %s256, 32
        %s258 = smul.addr %s257, 4
        %s259 = scalar_lea.vmem %s1, %s258
        %p260 = pneg %p78
        %p261 = pneg %p75
        %p262 = scmp.lt.s32.totalorder %s23, 1
        %s263 = scalar_select %p262, %s23, 1
        %s264 = smul.addr %s263, 64
        %s265 = smul.addr %s264, 4
        %s266 = scalar_lea.vmem %s2, %s265
        %p267 = pneg %p104
        %p268 = pneg %p101
        %p269 = scmp.lt.s32.totalorder %s23, 1
        %s270 = scalar_select %p269, %s23, 1
        %s271 = smul.addr %s270, 32
        %s272 = smul.addr %s271, 8
        %s273 = scalar_lea.vmem %s3, %s272
        %p274 = pneg %p130
        %p275 = pneg %p127
        %p276 = scmp.lt.s32.totalorder %s23, 1
        %s277 = scalar_select %p276, %s23, 1
        %s278 = smul.addr %s277, 2
        %s279 = smul.addr %s278, 4
        %s280 = scalar_lea.vmem %s4, %s279
        %p281 = pneg %p156
        %p282 = pneg %p153
        %p283 = pneg %p184
        %p284 = pneg %p181
        %s285 = sand.u32 %s171, 1
        %s286 = scalar_lea.sflag [#allocation3], %s285
        %s287 = sand.u32 %s171, 1
        %s288 = scalar_lea.vmem [#allocation2], %s287
        %p289 = scmp.lt.s32.totalorder %s24, 0
        %s290 = scalar_select %p289, %s24, 0
        %s291 = smul.addr %s290, 4
        %s292 = scalar_lea.vmem %s0, %s291
        %p293 = scmp.lt.s32.totalorder %s23, 1
        %s294 = scalar_select %p293, %s23, 1
        %s295 = smul.addr %s294, 32
        %s296 = smul.addr %s295, 4
        %s297 = scalar_lea.vmem %s1, %s296
        %p298 = scmp.lt.s32.totalorder %s23, 1
        %s299 = scalar_select %p298, %s23, 1
        %s300 = smul.addr %s299, 64
        %s301 = smul.addr %s300, 4
        %s302 = scalar_lea.vmem %s2, %s301
        %p303 = scmp.lt.s32.totalorder %s23, 1
        %s304 = scalar_select %p303, %s23, 1
        %s305 = smul.addr %s304, 32
        %s306 = smul.addr %s305, 8
        %s307 = scalar_lea.vmem %s3, %s306
        %p308 = scmp.lt.s32.totalorder %s23, 1
        %s309 = scalar_select %p308, %s23, 1
        %s310 = smul.addr %s309, 2
        %s311 = smul.addr %s310, 4
        %s312 = scalar_lea.vmem %s4, %s311
        %v314 = vld [vmem:[%s297] sm:$0xf]
        %v315 = vld [vmem:[%s297 + $0x4] sm:$0xf]
        %v316 = vld [vmem:[%s297 + $0x8] sm:$0xf]
        %v317 = vld [vmem:[%s297 + $0xc] sm:$0xf]
        %v318 = vld [vmem:[%s297 + $0x10] sm:$0xf]
        %v319 = vld [vmem:[%s297 + $0x14] sm:$0xf]
        %v320 = vld [vmem:[%s297 + $0x18] sm:$0xf]
        %v321 = vld [vmem:[%s297 + $0x1c] sm:$0xf]
        %v322 = vld [vmem:[%s297 + $0x20] sm:$0xf]
        %v323 = vld [vmem:[%s297 + $0x24] sm:$0xf]
        %v324 = vld [vmem:[%s297 + $0x28] sm:$0xf]
        %v325 = vld [vmem:[%s297 + $0x2c] sm:$0xf]
        %v326 = vld [vmem:[%s297 + $0x30] sm:$0xf]
        %v327 = vld [vmem:[%s297 + $0x34] sm:$0xf]
        %v328 = vld [vmem:[%s297 + $0x38] sm:$0xf]
        %v329 = vld [vmem:[%s297 + $0x3c] sm:$0xf]
        %v330 = vld [vmem:[%s297 + $0x40] sm:$0xf]
        %v331 = vld [vmem:[%s297 + $0x44] sm:$0xf]
        %v332 = vld [vmem:[%s297 + $0x48] sm:$0xf]
        %v333 = vld [vmem:[%s297 + $0x4c] sm:$0xf]
        %v334 = vld [vmem:[%s297 + $0x50] sm:$0xf]
        %v335 = vld [vmem:[%s297 + $0x54] sm:$0xf]
        %v336 = vld [vmem:[%s297 + $0x58] sm:$0xf]
        %v337 = vld [vmem:[%s297 + $0x5c] sm:$0xf]
        %v338 = vld [vmem:[%s297 + $0x60] sm:$0xf]
        %v339 = vld [vmem:[%s297 + $0x64] sm:$0xf]
        %v340 = vld [vmem:[%s297 + $0x68] sm:$0xf]
        %v341 = vld [vmem:[%s297 + $0x6c] sm:$0xf]
        %v342 = vld [vmem:[%s297 + $0x70] sm:$0xf]
        %v343 = vld [vmem:[%s297 + $0x74] sm:$0xf]
        %v344 = vld [vmem:[%s297 + $0x78] sm:$0xf]
        %v345 = vld [vmem:[%s297 + $0x7c] sm:$0xf]
        %v346 = vld [vmem:[%s292] sm:$0xf]
        %v379 = vunpack.c.l.b16 %v314
        %v380 = vunpack.c.l.b16 %v315
        %v381 = vunpack.c.l.b16 %v316
        %v382 = vunpack.c.l.b16 %v317
        %v383 = vunpack.c.l.b16 %v318
        %v384 = vunpack.c.l.b16 %v319
        %v385 = vunpack.c.l.b16 %v320
        %v386 = vunpack.c.l.b16 %v321
        %v387 = vunpack.c.l.b16 %v322
        %v388 = vunpack.c.l.b16 %v323
        %v389 = vunpack.c.l.b16 %v324
        %v390 = vunpack.c.l.b16 %v325
        %v391 = vunpack.c.l.b16 %v326
        %v392 = vunpack.c.l.b16 %v327
        %v393 = vunpack.c.l.b16 %v328
        %v394 = vunpack.c.l.b16 %v329
        %v395 = vunpack.c.l.b16 %v330
        %v396 = vunpack.c.l.b16 %v331
        %v397 = vunpack.c.l.b16 %v332
        %v398 = vunpack.c.l.b16 %v333
        %v399 = vunpack.c.l.b16 %v334
        %v400 = vunpack.c.l.b16 %v335
        %v401 = vunpack.c.l.b16 %v336
        %v402 = vunpack.c.l.b16 %v337
        %v403 = vunpack.c.l.b16 %v338
        %v404 = vunpack.c.l.b16 %v339
        %v405 = vunpack.c.l.b16 %v340
        %v406 = vunpack.c.l.b16 %v341
        %v407 = vunpack.c.l.b16 %v342
        %v408 = vunpack.c.l.b16 %v343
        %v409 = vunpack.c.l.b16 %v344
        %v410 = vunpack.c.l.b16 %v345
        %v411 = vpack.c.b16 %v380, %v379
        %v412 = vpack.c.b16 %v382, %v381
        %v413 = vpack.c.b16 %v384, %v383
        %v414 = vpack.c.b16 %v386, %v385
        %v415 = vpack.c.b16 %v388, %v387
        %v416 = vpack.c.b16 %v390, %v389
        %v417 = vpack.c.b16 %v392, %v391
        %v418 = vpack.c.b16 %v394, %v393
        %v419 = vpack.c.b16 %v396, %v395
        %v420 = vpack.c.b16 %v398, %v397
        %v421 = vpack.c.b16 %v400, %v399
        %v422 = vpack.c.b16 %v402, %v401
        %v423 = vpack.c.b16 %v404, %v403
        %v424 = vpack.c.b16 %v406, %v405
        %v425 = vpack.c.b16 %v408, %v407
        %v426 = vpack.c.b16 %v410, %v409
        %vm427 = vcmask 64512
        %v429 = vsel %vm427, %v411, 0
        %v432 = vsel %vm427, %v412, 0
        %v435 = vsel %vm427, %v413, 0
        %v438 = vsel %vm427, %v414, 0
        %v441 = vsel %vm427, %v415, 0
        %v444 = vsel %vm427, %v416, 0
        %v447 = vsel %vm427, %v417, 0
        %v450 = vsel %vm427, %v418, 0
        %v453 = vsel %vm427, %v419, 0
        %v456 = vsel %vm427, %v420, 0
        %v459 = vsel %vm427, %v421, 0
        %v462 = vsel %vm427, %v422, 0
        %v465 = vsel %vm427, %v423, 0
        %v468 = vsel %vm427, %v424, 0
        %v471 = vsel %vm427, %v425, 0
        %v474 = vsel %vm427, %v426, 0
        %vm476 = vcmask 1043456
        %v478 = vsel %vm476, %v346, 0
        %480 = vmatprep.subr.bf16.mxu0 0
        %481 = vmatpush1.bf16.msra.mxu0 %v478
        %482 = vmatprep.subr.bf16.mxu0 0
        %483 = vmatpush1.bf16.msra.mxu0 0
        %484 = vmatprep.subr.bf16.mxu0 0
        %485 = vmatpush1.bf16.msra.mxu0 0
        %486 = vmatprep.subr.bf16.mxu0 0
        %487 = vmatpush1.bf16.msra.mxu0 0
        %488 = vmatprep.subr.bf16.mxu0 0
        %489 = vmatpush1.bf16.msra.mxu0 0
        %490 = vmatprep.subr.bf16.mxu0 0
        %491 = vmatpush1.bf16.msra.mxu0 0
        %492 = vmatprep.subr.bf16.mxu0 0
        %493 = vmatpush1.bf16.msra.mxu0 0
        %494 = vmatprep.subr.bf16.mxu0 0
        %495 = vmatpush1.bf16.msra.mxu0 0
        %496 = vmatprep.subr.bf16.mxu0 0
        %497 = vmatpush1.bf16.msra.mxu0 0
        %498 = vmatprep.subr.bf16.mxu0 0
        %499 = vmatpush1.bf16.msra.mxu0 0
        %500 = vmatprep.subr.bf16.mxu0 0
        %501 = vmatpush1.bf16.msra.mxu0 0
        %502 = vmatprep.subr.bf16.mxu0 0
        %503 = vmatpush1.bf16.msra.mxu0 0
        %504 = vmatprep.subr.bf16.mxu0 0
        %505 = vmatpush1.bf16.msra.mxu0 0
        %506 = vmatprep.subr.bf16.mxu0 0
        %507 = vmatpush1.bf16.msra.mxu0 0
        %508 = vmatprep.subr.bf16.mxu0 0
        %509 = vmatpush1.bf16.msra.mxu0 0
        %510 = vmatprep.subr.bf16.mxu0 0
        %511 = vmatpush1.bf16.msra.mxu0 0
        %512 = vmatprep.mubr.bf16.mxu0 0
        %513 = vmatmul.mubr.bf16.gmra.mrb[0].mxu0 %v429
        %v514 = vpop.f32.mrb[0].mxu0
        %v515 = vadd.f32 0.0, %v514
        %v516 = vpop.f32.mrb[0].mxu0
        %v517 = vpop.f32.mrb[0].mxu0
        %v518 = vadd.f32 0.0, %v517
        %v519 = vpop.f32.mrb[0].mxu0
        %520 = vmatprep.mubr.bf16.mxu0 0
        %521 = vmatmul.mubr.bf16.gmra.mrb[0].mxu0 %v432
        %v522 = vpop.f32.mrb[0].mxu0
        %v523 = vadd.f32 0.0, %v522
        %v524 = vpop.f32.mrb[0].mxu0
        %v525 = vpop.f32.mrb[0].mxu0
        %v526 = vadd.f32 0.0, %v525
        %v527 = vpop.f32.mrb[0].mxu0
        %528 = vmatprep.mubr.bf16.mxu0 0
        %529 = vmatmul.mubr.bf16.gmra.mrb[0].mxu0 %v435
        %v530 = vpop.f32.mrb[0].mxu0
        %v531 = vadd.f32 0.0, %v530
        %v532 = vpop.f32.mrb[0].mxu0
        %v533 = vpop.f32.mrb[0].mxu0
        %v534 = vadd.f32 0.0, %v533
        %v535 = vpop.f32.mrb[0].mxu0
        %536 = vmatprep.mubr.bf16.mxu0 0
        %537 = vmatmul.mubr.bf16.gmra.mrb[0].mxu0 %v438
        %v538 = vpop.f32.mrb[0].mxu0
        %v539 = vadd.f32 0.0, %v538
        %v540 = vpop.f32.mrb[0].mxu0
        %v541 = vpop.f32.mrb[0].mxu0
        %v542 = vadd.f32 0.0, %v541
        %v543 = vpop.f32.mrb[0].mxu0
        %544 = vmatprep.mubr.bf16.mxu0 0
        %545 = vmatmul.mubr.bf16.gmra.mrb[0].mxu0 %v441
        %v546 = vpop.f32.mrb[0].mxu0
        %v547 = vadd.f32 0.0, %v546
        %v548 = vpop.f32.mrb[0].mxu0
        %v549 = vpop.f32.mrb[0].mxu0
        %v550 = vadd.f32 0.0, %v549
        %v551 = vpop.f32.mrb[0].mxu0
        %552 = vmatprep.mubr.bf16.mxu0 0
        %553 = vmatmul.mubr.bf16.gmra.mrb[0].mxu0 %v444
        %v554 = vpop.f32.mrb[0].mxu0
        %v555 = vadd.f32 0.0, %v554
        %v556 = vpop.f32.mrb[0].mxu0
        %v557 = vpop.f32.mrb[0].mxu0
        %v558 = vadd.f32 0.0, %v557
        %v559 = vpop.f32.mrb[0].mxu0
        %560 = vmatprep.mubr.bf16.mxu0 0
        %561 = vmatmul.mubr.bf16.gmra.mrb[0].mxu0 %v447
        %v562 = vpop.f32.mrb[0].mxu0
        %v563 = vadd.f32 0.0, %v562
        %v564 = vpop.f32.mrb[0].mxu0
        %v565 = vpop.f32.mrb[0].mxu0
        %v566 = vadd.f32 0.0, %v565
        %v567 = vpop.f32.mrb[0].mxu0
        %568 = vmatprep.mubr.bf16.mxu0 0
        %569 = vmatmul.mubr.bf16.gmra.mrb[0].mxu0 %v450
        %v570 = vpop.f32.mrb[0].mxu0
        %v571 = vadd.f32 0.0, %v570
        %v572 = vpop.f32.mrb[0].mxu0
        %v573 = vpop.f32.mrb[0].mxu0
        %v574 = vadd.f32 0.0, %v573
        %v575 = vpop.f32.mrb[0].mxu0
        %576 = vmatprep.mubr.bf16.mxu0 0
        %577 = vmatmul.mubr.bf16.gmra.mrb[0].mxu0 %v453
        %v578 = vpop.f32.mrb[0].mxu0
        %v579 = vadd.f32 0.0, %v578
        %v580 = vpop.f32.mrb[0].mxu0
        %v581 = vpop.f32.mrb[0].mxu0
        %v582 = vadd.f32 0.0, %v581
        %v583 = vpop.f32.mrb[0].mxu0
        %584 = vmatprep.mubr.bf16.mxu0 0
        %585 = vmatmul.mubr.bf16.gmra.mrb[0].mxu0 %v456
        %v586 = vpop.f32.mrb[0].mxu0
        %v587 = vadd.f32 0.0, %v586
        %v588 = vpop.f32.mrb[0].mxu0
        %v589 = vpop.f32.mrb[0].mxu0
        %v590 = vadd.f32 0.0, %v589
        %v591 = vpop.f32.mrb[0].mxu0
        %592 = vmatprep.mubr.bf16.mxu0 0
        %593 = vmatmul.mubr.bf16.gmra.mrb[0].mxu0 %v459
        %v594 = vpop.f32.mrb[0].mxu0
        %v595 = vadd.f32 0.0, %v594
        %v596 = vpop.f32.mrb[0].mxu0
        %v597 = vpop.f32.mrb[0].mxu0
        %v598 = vadd.f32 0.0, %v597
        %v599 = vpop.f32.mrb[0].mxu0
        %600 = vmatprep.mubr.bf16.mxu0 0
        %601 = vmatmul.mubr.bf16.gmra.mrb[0].mxu0 %v462
        %v602 = vpop.f32.mrb[0].mxu0
        %v603 = vadd.f32 0.0, %v602
        %v604 = vpop.f32.mrb[0].mxu0
        %v605 = vpop.f32.mrb[0].mxu0
        %v606 = vadd.f32 0.0, %v605
        %v607 = vpop.f32.mrb[0].mxu0
        %608 = vmatprep.mubr.bf16.mxu0 0
        %609 = vmatmul.mubr.bf16.gmra.mrb[0].mxu0 %v465
        %v610 = vpop.f32.mrb[0].mxu0
        %v611 = vadd.f32 0.0, %v610
        %v612 = vpop.f32.mrb[0].mxu0
        %v613 = vpop.f32.mrb[0].mxu0
        %v614 = vadd.f32 0.0, %v613
        %v615 = vpop.f32.mrb[0].mxu0
        %616 = vmatprep.mubr.bf16.mxu0 0
        %617 = vmatmul.mubr.bf16.gmra.mrb[0].mxu0 %v468
        %v618 = vpop.f32.mrb[0].mxu0
        %v619 = vadd.f32 0.0, %v618
        %v620 = vpop.f32.mrb[0].mxu0
        %v621 = vpop.f32.mrb[0].mxu0
        %v622 = vadd.f32 0.0, %v621
        %v623 = vpop.f32.mrb[0].mxu0
        %624 = vmatprep.mubr.bf16.mxu0 0
        %625 = vmatmul.mubr.bf16.gmra.mrb[0].mxu0 %v471
        %v626 = vpop.f32.mrb[0].mxu0
        %v627 = vadd.f32 0.0, %v626
        %v628 = vpop.f32.mrb[0].mxu0
        %v629 = vpop.f32.mrb[0].mxu0
        %v630 = vadd.f32 0.0, %v629
        %v631 = vpop.f32.mrb[0].mxu0
        %632 = vmatprep.mubr.bf16.mxu0 0
        %633 = vmatmul.mubr.bf16.gmra.mrb[0].mxu0 %v474
        %v634 = vpop.f32.mrb[0].mxu0
        %v635 = vadd.f32 0.0, %v634
        %v636 = vpop.f32.mrb[0].mxu0
        %v637 = vpop.f32.mrb[0].mxu0
        %v638 = vadd.f32 0.0, %v637
        %v639 = vpop.f32.mrb[0].mxu0
        %640 = vdwg.mxu0
        %v641 = vmax.f32 %v515, 0.0
        %v642 = vmax.f32 %v518, 0.0
        %v643 = vmax.f32 %v523, 0.0
        %v644 = vmax.f32 %v526, 0.0
        %v645 = vmax.f32 %v531, 0.0
        %v646 = vmax.f32 %v534, 0.0
        %v647 = vmax.f32 %v539, 0.0
        %v648 = vmax.f32 %v542, 0.0
        %v649 = vmax.f32 %v547, 0.0
        %v650 = vmax.f32 %v550, 0.0
        %v651 = vmax.f32 %v555, 0.0
        %v652 = vmax.f32 %v558, 0.0
        %v653 = vmax.f32 %v563, 0.0
        %v654 = vmax.f32 %v566, 0.0
        %v655 = vmax.f32 %v571, 0.0
        %v656 = vmax.f32 %v574, 0.0
        %v657 = vmax.f32 %v579, 0.0
        %v658 = vmax.f32 %v582, 0.0
        %v659 = vmax.f32 %v587, 0.0
        %v660 = vmax.f32 %v590, 0.0
        %v661 = vmax.f32 %v595, 0.0
        %v662 = vmax.f32 %v598, 0.0
        %v663 = vmax.f32 %v603, 0.0
        %v664 = vmax.f32 %v606, 0.0
        %v665 = vmax.f32 %v611, 0.0
        %v666 = vmax.f32 %v614, 0.0
        %v667 = vmax.f32 %v619, 0.0
        %v668 = vmax.f32 %v622, 0.0
        %v669 = vmax.f32 %v627, 0.0
        %v670 = vmax.f32 %v630, 0.0
        %v671 = vmax.f32 %v635, 0.0
        %v672 = vmax.f32 %v638, 0.0
        %v673 = vld [vmem:[%s302] sm:$0xff]
        %v674 = vld [vmem:[%s302 + $0x8] sm:$0xff]
        %v675 = vld [vmem:[%s302 + $0x10] sm:$0xff]
        %v676 = vld [vmem:[%s302 + $0x18] sm:$0xff]
        %v677 = vld [vmem:[%s302 + $0x20] sm:$0xff]
        %v678 = vld [vmem:[%s302 + $0x28] sm:$0xff]
        %v679 = vld [vmem:[%s302 + $0x30] sm:$0xff]
        %v680 = vld [vmem:[%s302 + $0x38] sm:$0xff]
        %v681 = vld [vmem:[%s302 + $0x40] sm:$0xff]
        %v682 = vld [vmem:[%s302 + $0x48] sm:$0xff]
        %v683 = vld [vmem:[%s302 + $0x50] sm:$0xff]
        %v684 = vld [vmem:[%s302 + $0x58] sm:$0xff]
        %v685 = vld [vmem:[%s302 + $0x60] sm:$0xff]
        %v686 = vld [vmem:[%s302 + $0x68] sm:$0xff]
        %v687 = vld [vmem:[%s302 + $0x70] sm:$0xff]
        %v688 = vld [vmem:[%s302 + $0x78] sm:$0xff]
        %v689 = vld [vmem:[%s302 + $0x80] sm:$0xff]
        %v690 = vld [vmem:[%s302 + $0x88] sm:$0xff]
        %v691 = vld [vmem:[%s302 + $0x90] sm:$0xff]
        %v692 = vld [vmem:[%s302 + $0x98] sm:$0xff]
        %v693 = vld [vmem:[%s302 + $0xa0] sm:$0xff]
        %v694 = vld [vmem:[%s302 + $0xa8] sm:$0xff]
        %v695 = vld [vmem:[%s302 + $0xb0] sm:$0xff]
        %v696 = vld [vmem:[%s302 + $0xb8] sm:$0xff]
        %v697 = vld [vmem:[%s302 + $0xc0] sm:$0xff]
        %v698 = vld [vmem:[%s302 + $0xc8] sm:$0xff]
        %v699 = vld [vmem:[%s302 + $0xd0] sm:$0xff]
        %v700 = vld [vmem:[%s302 + $0xd8] sm:$0xff]
        %v701 = vld [vmem:[%s302 + $0xe0] sm:$0xff]
        %v702 = vld [vmem:[%s302 + $0xe8] sm:$0xff]
        %v703 = vld [vmem:[%s302 + $0xf0] sm:$0xff]
        %v704 = vld [vmem:[%s302 + $0xf8] sm:$0xff]
        %v705 = vpack.c.bf16 %v642, %v641
        %v706 = vpack.c.bf16 %v644, %v643
        %v707 = vpack.c.bf16 %v646, %v645
        %v708 = vpack.c.bf16 %v648, %v647
        %v709 = vpack.c.bf16 %v650, %v649
        %v710 = vpack.c.bf16 %v652, %v651
        %v711 = vpack.c.bf16 %v654, %v653
        %v712 = vpack.c.bf16 %v656, %v655
        %v713 = vpack.c.bf16 %v658, %v657
        %v714 = vpack.c.bf16 %v660, %v659
        %v715 = vpack.c.bf16 %v662, %v661
        %v716 = vpack.c.bf16 %v664, %v663
        %v717 = vpack.c.bf16 %v666, %v665
        %v718 = vpack.c.bf16 %v668, %v667
        %v719 = vpack.c.bf16 %v670, %v669
        %v720 = vpack.c.bf16 %v672, %v671
        %v721 = vld [vmem:[%s307] sm:$0xff]
        %v722 = vld [vmem:[%s307 + $0x8] sm:$0xff]
        %v723 = vld [vmem:[%s307 + $0x10] sm:$0xff]
        %v724 = vld [vmem:[%s307 + $0x18] sm:$0xff]
        %v725 = vld [vmem:[%s307 + $0x20] sm:$0xff]
        %v726 = vld [vmem:[%s307 + $0x28] sm:$0xff]
        %v727 = vld [vmem:[%s307 + $0x30] sm:$0xff]
        %v728 = vld [vmem:[%s307 + $0x38] sm:$0xff]
        %v729 = vld [vmem:[%s307 + $0x40] sm:$0xff]
        %v730 = vld [vmem:[%s307 + $0x48] sm:$0xff]
        %v731 = vld [vmem:[%s307 + $0x50] sm:$0xff]
        %v732 = vld [vmem:[%s307 + $0x58] sm:$0xff]
        %v733 = vld [vmem:[%s307 + $0x60] sm:$0xff]
        %v734 = vld [vmem:[%s307 + $0x68] sm:$0xff]
        %v735 = vld [vmem:[%s307 + $0x70] sm:$0xff]
        %v736 = vld [vmem:[%s307 + $0x78] sm:$0xff]
        %v737 = vld [vmem:[%s307 + $0x80] sm:$0xff]
        %v738 = vld [vmem:[%s307 + $0x88] sm:$0xff]
        %v739 = vld [vmem:[%s307 + $0x90] sm:$0xff]
        %v740 = vld [vmem:[%s307 + $0x98] sm:$0xff]
        %v741 = vld [vmem:[%s307 + $0xa0] sm:$0xff]
        %v742 = vld [vmem:[%s307 + $0xa8] sm:$0xff]
        %v743 = vld [vmem:[%s307 + $0xb0] sm:$0xff]
        %v744 = vld [vmem:[%s307 + $0xb8] sm:$0xff]
        %v745 = vld [vmem:[%s307 + $0xc0] sm:$0xff]
        %v746 = vld [vmem:[%s307 + $0xc8] sm:$0xff]
        %v747 = vld [vmem:[%s307 + $0xd0] sm:$0xff]
        %v748 = vld [vmem:[%s307 + $0xd8] sm:$0xff]
        %v749 = vld [vmem:[%s307 + $0xe0] sm:$0xff]
        %v750 = vld [vmem:[%s307 + $0xe8] sm:$0xff]
        %v751 = vld [vmem:[%s307 + $0xf0] sm:$0xff]
        %v752 = vld [vmem:[%s307 + $0xf8] sm:$0xff]
        %754 = vset.pattern.permute.xlu0 0
        %755 = vperm.xlu0 %754, %v721
        %v756 = vpop.permute.xlu0 %755
        %759 = vset.pattern.permute.xlu0 0
        %760 = vperm.xlu0 %759, %v722
        %v761 = vpop.permute.xlu0 %760
        %764 = vset.pattern.permute.xlu0 0
        %765 = vperm.xlu0 %764, %v723
        %v766 = vpop.permute.xlu0 %765
        %769 = vset.pattern.permute.xlu0 0
        %770 = vperm.xlu0 %769, %v724
        %v771 = vpop.permute.xlu0 %770
        %774 = vset.pattern.permute.xlu0 0
        %775 = vperm.xlu0 %774, %v725
        %v776 = vpop.permute.xlu0 %775
        %779 = vset.pattern.permute.xlu0 0
        %780 = vperm.xlu0 %779, %v726
        %v781 = vpop.permute.xlu0 %780
        %784 = vset.pattern.permute.xlu0 0
        %785 = vperm.xlu0 %784, %v727
        %v786 = vpop.permute.xlu0 %785
        %789 = vset.pattern.permute.xlu0 0
        %790 = vperm.xlu0 %789, %v728
        %v791 = vpop.permute.xlu0 %790
        %794 = vset.pattern.permute.xlu0 0
        %795 = vperm.xlu0 %794, %v729
        %v796 = vpop.permute.xlu0 %795
        %799 = vset.pattern.permute.xlu0 0
        %800 = vperm.xlu0 %799, %v730
        %v801 = vpop.permute.xlu0 %800
        %804 = vset.pattern.permute.xlu0 0
        %805 = vperm.xlu0 %804, %v731
        %v806 = vpop.permute.xlu0 %805
        %809 = vset.pattern.permute.xlu0 0
        %810 = vperm.xlu0 %809, %v732
        %v811 = vpop.permute.xlu0 %810
        %814 = vset.pattern.permute.xlu0 0
        %815 = vperm.xlu0 %814, %v733
        %v816 = vpop.permute.xlu0 %815
        %819 = vset.pattern.permute.xlu0 0
        %820 = vperm.xlu0 %819, %v734
        %v821 = vpop.permute.xlu0 %820
        %824 = vset.pattern.permute.xlu0 0
        %825 = vperm.xlu0 %824, %v735
        %v826 = vpop.permute.xlu0 %825
        %829 = vset.pattern.permute.xlu0 0
        %830 = vperm.xlu0 %829, %v736
        %v831 = vpop.permute.xlu0 %830
        %834 = vset.pattern.permute.xlu0 0
        %835 = vperm.xlu0 %834, %v737
        %v836 = vpop.permute.xlu0 %835
        %839 = vset.pattern.permute.xlu0 0
        %840 = vperm.xlu0 %839, %v738
        %v841 = vpop.permute.xlu0 %840
        %844 = vset.pattern.permute.xlu0 0
        %845 = vperm.xlu0 %844, %v739
        %v846 = vpop.permute.xlu0 %845
        %849 = vset.pattern.permute.xlu0 0
        %850 = vperm.xlu0 %849, %v740
        %v851 = vpop.permute.xlu0 %850
        %854 = vset.pattern.permute.xlu0 0
        %855 = vperm.xlu0 %854, %v741
        %v856 = vpop.permute.xlu0 %855
        %859 = vset.pattern.permute.xlu0 0
        %860 = vperm.xlu0 %859, %v742
        %v861 = vpop.permute.xlu0 %860
        %864 = vset.pattern.permute.xlu0 0
        %865 = vperm.xlu0 %864, %v743
        %v866 = vpop.permute.xlu0 %865
        %869 = vset.pattern.permute.xlu0 0
        %870 = vperm.xlu0 %869, %v744
        %v871 = vpop.permute.xlu0 %870
        %874 = vset.pattern.permute.xlu0 0
        %875 = vperm.xlu0 %874, %v745
        %v876 = vpop.permute.xlu0 %875
        %879 = vset.pattern.permute.xlu0 0
        %880 = vperm.xlu0 %879, %v746
        %v881 = vpop.permute.xlu0 %880
        %884 = vset.pattern.permute.xlu0 0
        %885 = vperm.xlu0 %884, %v747
        %v886 = vpop.permute.xlu0 %885
        %889 = vset.pattern.permute.xlu0 0
        %890 = vperm.xlu0 %889, %v748
        %v891 = vpop.permute.xlu0 %890
        %894 = vset.pattern.permute.xlu0 0
        %895 = vperm.xlu0 %894, %v749
        %v896 = vpop.permute.xlu0 %895
        %899 = vset.pattern.permute.xlu0 0
        %900 = vperm.xlu0 %899, %v750
        %v901 = vpop.permute.xlu0 %900
        %904 = vset.pattern.permute.xlu0 0
        %905 = vperm.xlu0 %904, %v751
        %v906 = vpop.permute.xlu0 %905
        %909 = vset.pattern.permute.xlu0 0
        %910 = vperm.xlu0 %909, %v752
        %v911 = vpop.permute.xlu0 %910
        %v945 = vunpack.c.l.b16 %v673
        %v946 = vunpack.c.h.b16 %v673
        %v947 = vunpack.c.l.b16 %v674
        %v948 = vunpack.c.h.b16 %v674
        %v949 = vunpack.c.l.b16 %v675
        %v950 = vunpack.c.h.b16 %v675
        %v951 = vunpack.c.l.b16 %v676
        %v952 = vunpack.c.h.b16 %v676
        %v953 = vunpack.c.l.b16 %v677
        %v954 = vunpack.c.h.b16 %v677
        %v955 = vunpack.c.l.b16 %v678
        %v956 = vunpack.c.h.b16 %v678
        %v957 = vunpack.c.l.b16 %v679
        %v958 = vunpack.c.h.b16 %v679
        %v959 = vunpack.c.l.b16 %v680
        %v960 = vunpack.c.h.b16 %v680
        %v961 = vunpack.c.l.b16 %v681
        %v962 = vunpack.c.h.b16 %v681
        %v963 = vunpack.c.l.b16 %v682
        %v964 = vunpack.c.h.b16 %v682
        %v965 = vunpack.c.l.b16 %v683
        %v966 = vunpack.c.h.b16 %v683
        %v967 = vunpack.c.l.b16 %v684
        %v968 = vunpack.c.h.b16 %v684
        %v969 = vunpack.c.l.b16 %v685
        %v970 = vunpack.c.h.b16 %v685
        %v971 = vunpack.c.l.b16 %v686
        %v972 = vunpack.c.h.b16 %v686
        %v973 = vunpack.c.l.b16 %v687
        %v974 = vunpack.c.h.b16 %v687
        %v975 = vunpack.c.l.b16 %v688
        %v976 = vunpack.c.h.b16 %v688
        %v977 = vunpack.c.l.b16 %v689
        %v978 = vunpack.c.h.b16 %v689
        %v979 = vunpack.c.l.b16 %v690
        %v980 = vunpack.c.h.b16 %v690
        %v981 = vunpack.c.l.b16 %v691
        %v982 = vunpack.c.h.b16 %v691
        %v983 = vunpack.c.l.b16 %v692
        %v984 = vunpack.c.h.b16 %v692
        %v985 = vunpack.c.l.b16 %v693
        %v986 = vunpack.c.h.b16 %v693
        %v987 = vunpack.c.l.b16 %v694
        %v988 = vunpack.c.h.b16 %v694
        %v989 = vunpack.c.l.b16 %v695
        %v990 = vunpack.c.h.b16 %v695
        %v991 = vunpack.c.l.b16 %v696
        %v992 = vunpack.c.h.b16 %v696
        %v993 = vunpack.c.l.b16 %v697
        %v994 = vunpack.c.h.b16 %v697
        %v995 = vunpack.c.l.b16 %v698
        %v996 = vunpack.c.h.b16 %v698
        %v997 = vunpack.c.l.b16 %v699
        %v998 = vunpack.c.h.b16 %v699
        %v999 = vunpack.c.l.b16 %v700
        %v1000 = vunpack.c.h.b16 %v700
        %v1001 = vunpack.c.l.b16 %v701
        %v1002 = vunpack.c.h.b16 %v701
        %v1003 = vunpack.c.l.b16 %v702
        %v1004 = vunpack.c.h.b16 %v702
        %v1005 = vunpack.c.l.b16 %v703
        %v1006 = vunpack.c.h.b16 %v703
        %v1007 = vunpack.c.l.b16 %v704
        %v1008 = vunpack.c.h.b16 %v704
        %v1009 = vpack.c.b16 %v947, %v945
        %v1010 = vpack.c.b16 %v948, %v946
        %v1011 = vpack.c.b16 %v951, %v949
        %v1012 = vpack.c.b16 %v952, %v950
        %v1013 = vpack.c.b16 %v955, %v953
        %v1014 = vpack.c.b16 %v956, %v954
        %v1015 = vpack.c.b16 %v959, %v957
        %v1016 = vpack.c.b16 %v960, %v958
        %v1017 = vpack.c.b16 %v963, %v961
        %v1018 = vpack.c.b16 %v964, %v962
        %v1019 = vpack.c.b16 %v967, %v965
        %v1020 = vpack.c.b16 %v968, %v966
        %v1021 = vpack.c.b16 %v971, %v969
        %v1022 = vpack.c.b16 %v972, %v970
        %v1023 = vpack.c.b16 %v975, %v973
        %v1024 = vpack.c.b16 %v976, %v974
        %v1025 = vpack.c.b16 %v979, %v977
        %v1026 = vpack.c.b16 %v980, %v978
        %v1027 = vpack.c.b16 %v983, %v981
        %v1028 = vpack.c.b16 %v984, %v982
        %v1029 = vpack.c.b16 %v987, %v985
        %v1030 = vpack.c.b16 %v988, %v986
        %v1031 = vpack.c.b16 %v991, %v989
        %v1032 = vpack.c.b16 %v992, %v990
        %v1033 = vpack.c.b16 %v995, %v993
        %v1034 = vpack.c.b16 %v996, %v994
        %v1035 = vpack.c.b16 %v999, %v997
        %v1036 = vpack.c.b16 %v1000, %v998
        %v1037 = vpack.c.b16 %v1003, %v1001
        %v1038 = vpack.c.b16 %v1004, %v1002
        %v1039 = vpack.c.b16 %v1007, %v1005
        %v1040 = vpack.c.b16 %v1008, %v1006
        %1073 = vmatprep.subr.bf16.mxu0 0
        %1074 = vmatpush1.bf16.msra.mxu0 %v705
        %1075 = vmatprep.subr.bf16.mxu0 0
        %1076 = vmatpush1.bf16.msra.mxu0 %v706
        %1077 = vmatprep.subr.bf16.mxu0 0
        %1078 = vmatpush1.bf16.msra.mxu0 %v707
        %1079 = vmatprep.subr.bf16.mxu0 0
        %1080 = vmatpush1.bf16.msra.mxu0 %v708
        %1081 = vmatprep.subr.bf16.mxu0 0
        %1082 = vmatpush1.bf16.msra.mxu0 %v709
        %1083 = vmatprep.subr.bf16.mxu0 0
        %1084 = vmatpush1.bf16.msra.mxu0 %v710
        %1085 = vmatprep.subr.bf16.mxu0 0
        %1086 = vmatpush1.bf16.msra.mxu0 %v711
        %1087 = vmatprep.subr.bf16.mxu0 0
        %1088 = vmatpush1.bf16.msra.mxu0 %v712
        %1089 = vmatprep.subr.bf16.mxu0 0
        %1090 = vmatpush1.bf16.msra.mxu0 %v713
        %1091 = vmatprep.subr.bf16.mxu0 0
        %1092 = vmatpush1.bf16.msra.mxu0 %v714
        %1093 = vmatprep.subr.bf16.mxu0 0
        %1094 = vmatpush1.bf16.msra.mxu0 %v715
        %1095 = vmatprep.subr.bf16.mxu0 0
        %1096 = vmatpush1.bf16.msra.mxu0 %v716
        %1097 = vmatprep.subr.bf16.mxu0 0
        %1098 = vmatpush1.bf16.msra.mxu0 %v717
        %1099 = vmatprep.subr.bf16.mxu0 0
        %1100 = vmatpush1.bf16.msra.mxu0 %v718
        %1101 = vmatprep.subr.bf16.mxu0 0
        %1102 = vmatpush1.bf16.msra.mxu0 %v719
        %1103 = vmatprep.subr.bf16.mxu0 0
        %1104 = vmatpush1.bf16.msra.mxu0 %v720
        %1105 = vmatprep.mubr.bf16.mxu0 %v1010
        %1106 = vmatmul.mubr.bf16.gmra.mrb[0].mxu0 %v1009
        %v1107 = vpop.f32.mrb[0].mxu0
        %v1108 = vadd.f32 %v756, %v1107
        %v1109 = vpop.f32.mrb[0].mxu0
        %v1110 = vpop.f32.mrb[0].mxu0
        %v1111 = vadd.f32 %v761, %v1110
        %v1112 = vpop.f32.mrb[0].mxu0
        %1113 = vmatprep.mubr.bf16.mxu0 %v1012
        %1114 = vmatmul.mubr.bf16.gmra.mrb[0].mxu0 %v1011
        %v1115 = vpop.f32.mrb[0].mxu0
        %v1116 = vadd.f32 %v766, %v1115
        %v1117 = vpop.f32.mrb[0].mxu0
        %v1118 = vpop.f32.mrb[0].mxu0
        %v1119 = vadd.f32 %v771, %v1118
        %v1120 = vpop.f32.mrb[0].mxu0
        %1121 = vmatprep.mubr.bf16.mxu0 %v1014
        %1122 = vmatmul.mubr.bf16.gmra.mrb[0].mxu0 %v1013
        %v1123 = vpop.f32.mrb[0].mxu0
        %v1124 = vadd.f32 %v776, %v1123
        %v1125 = vpop.f32.mrb[0].mxu0
        %v1126 = vpop.f32.mrb[0].mxu0
        %v1127 = vadd.f32 %v781, %v1126
        %v1128 = vpop.f32.mrb[0].mxu0
        %1129 = vmatprep.mubr.bf16.mxu0 %v1016
        %1130 = vmatmul.mubr.bf16.gmra.mrb[0].mxu0 %v1015
        %v1131 = vpop.f32.mrb[0].mxu0
        %v1132 = vadd.f32 %v786, %v1131
        %v1133 = vpop.f32.mrb[0].mxu0
        %v1134 = vpop.f32.mrb[0].mxu0
        %v1135 = vadd.f32 %v791, %v1134
        %v1136 = vpop.f32.mrb[0].mxu0
        %1137 = vmatprep.mubr.bf16.mxu0 %v1018
        %1138 = vmatmul.mubr.bf16.gmra.mrb[0].mxu0 %v1017
        %v1139 = vpop.f32.mrb[0].mxu0
        %v1140 = vadd.f32 %v796, %v1139
        %v1141 = vpop.f32.mrb[0].mxu0
        %v1142 = vpop.f32.mrb[0].mxu0
        %v1143 = vadd.f32 %v801, %v1142
        %v1144 = vpop.f32.mrb[0].mxu0
        %1145 = vmatprep.mubr.bf16.mxu0 %v1020
        %1146 = vmatmul.mubr.bf16.gmra.mrb[0].mxu0 %v1019
        %v1147 = vpop.f32.mrb[0].mxu0
        %v1148 = vadd.f32 %v806, %v1147
        %v1149 = vpop.f32.mrb[0].mxu0
        %v1150 = vpop.f32.mrb[0].mxu0
        %v1151 = vadd.f32 %v811, %v1150
        %v1152 = vpop.f32.mrb[0].mxu0
        %1153 = vmatprep.mubr.bf16.mxu0 %v1022
        %1154 = vmatmul.mubr.bf16.gmra.mrb[0].mxu0 %v1021
        %v1155 = vpop.f32.mrb[0].mxu0
        %v1156 = vadd.f32 %v816, %v1155
        %v1157 = vpop.f32.mrb[0].mxu0
        %v1158 = vpop.f32.mrb[0].mxu0
        %v1159 = vadd.f32 %v821, %v1158
        %v1160 = vpop.f32.mrb[0].mxu0
        %1161 = vmatprep.mubr.bf16.mxu0 %v1024
        %1162 = vmatmul.mubr.bf16.gmra.mrb[0].mxu0 %v1023
        %v1163 = vpop.f32.mrb[0].mxu0
        %v1164 = vadd.f32 %v826, %v1163
        %v1165 = vpop.f32.mrb[0].mxu0
        %v1166 = vpop.f32.mrb[0].mxu0
        %v1167 = vadd.f32 %v831, %v1166
        %v1168 = vpop.f32.mrb[0].mxu0
        %1169 = vmatprep.mubr.bf16.mxu0 %v1026
        %1170 = vmatmul.mubr.bf16.gmra.mrb[0].mxu0 %v1025
        %v1171 = vpop.f32.mrb[0].mxu0
        %v1172 = vadd.f32 %v836, %v1171
        %v1173 = vpop.f32.mrb[0].mxu0
        %v1174 = vpop.f32.mrb[0].mxu0
        %v1175 = vadd.f32 %v841, %v1174
        %v1176 = vpop.f32.mrb[0].mxu0
        %1177 = vmatprep.mubr.bf16.mxu0 %v1028
        %1178 = vmatmul.mubr.bf16.gmra.mrb[0].mxu0 %v1027
        %v1179 = vpop.f32.mrb[0].mxu0
        %v1180 = vadd.f32 %v846, %v1179
        %v1181 = vpop.f32.mrb[0].mxu0
        %v1182 = vpop.f32.mrb[0].mxu0
        %v1183 = vadd.f32 %v851, %v1182
        %v1184 = vpop.f32.mrb[0].mxu0
        %1185 = vmatprep.mubr.bf16.mxu0 %v1030
        %1186 = vmatmul.mubr.bf16.gmra.mrb[0].mxu0 %v1029
        %v1187 = vpop.f32.mrb[0].mxu0
        %v1188 = vadd.f32 %v856, %v1187
        %v1189 = vpop.f32.mrb[0].mxu0
        %v1190 = vpop.f32.mrb[0].mxu0
        %v1191 = vadd.f32 %v861, %v1190
        %v1192 = vpop.f32.mrb[0].mxu0
        %1193 = vmatprep.mubr.bf16.mxu0 %v1032
        %1194 = vmatmul.mubr.bf16.gmra.mrb[0].mxu0 %v1031
        %v1195 = vpop.f32.mrb[0].mxu0
        %v1196 = vadd.f32 %v866, %v1195
        %v1197 = vpop.f32.mrb[0].mxu0
        %v1198 = vpop.f32.mrb[0].mxu0
        %v1199 = vadd.f32 %v871, %v1198
        %v1200 = vpop.f32.mrb[0].mxu0
        %1201 = vmatprep.mubr.bf16.mxu0 %v1034
        %1202 = vmatmul.mubr.bf16.gmra.mrb[0].mxu0 %v1033
        %v1203 = vpop.f32.mrb[0].mxu0
        %v1204 = vadd.f32 %v876, %v1203
        %v1205 = vpop.f32.mrb[0].mxu0
        %v1206 = vpop.f32.mrb[0].mxu0
        %v1207 = vadd.f32 %v881, %v1206
        %v1208 = vpop.f32.mrb[0].mxu0
        %1209 = vmatprep.mubr.bf16.mxu0 %v1036
        %1210 = vmatmul.mubr.bf16.gmra.mrb[0].mxu0 %v1035
        %v1211 = vpop.f32.mrb[0].mxu0
        %v1212 = vadd.f32 %v886, %v1211
        %v1213 = vpop.f32.mrb[0].mxu0
        %v1214 = vpop.f32.mrb[0].mxu0
        %v1215 = vadd.f32 %v891, %v1214
        %v1216 = vpop.f32.mrb[0].mxu0
        %1217 = vmatprep.mubr.bf16.mxu0 %v1038
        %1218 = vmatmul.mubr.bf16.gmra.mrb[0].mxu0 %v1037
        %v1219 = vpop.f32.mrb[0].mxu0
        %v1220 = vadd.f32 %v896, %v1219
        %v1221 = vpop.f32.mrb[0].mxu0
        %v1222 = vpop.f32.mrb[0].mxu0
        %v1223 = vadd.f32 %v901, %v1222
        %v1224 = vpop.f32.mrb[0].mxu0
        %1225 = vmatprep.mubr.bf16.mxu0 %v1040
        %1226 = vmatmul.mubr.bf16.gmra.mrb[0].mxu0 %v1039
        %v1227 = vpop.f32.mrb[0].mxu0
        %v1228 = vadd.f32 %v906, %v1227
        %v1229 = vpop.f32.mrb[0].mxu0
        %v1230 = vpop.f32.mrb[0].mxu0
        %v1231 = vadd.f32 %v911, %v1230
        %v1232 = vpop.f32.mrb[0].mxu0
        %1233 = vdwg.mxu0
        %v1234 = vmax.f32 %v1108, 0.0
        %v1235 = vmax.f32 %v1111, 0.0
        %v1236 = vmax.f32 %v1116, 0.0
        %v1237 = vmax.f32 %v1119, 0.0
        %v1238 = vmax.f32 %v1124, 0.0
        %v1239 = vmax.f32 %v1127, 0.0
        %v1240 = vmax.f32 %v1132, 0.0
        %v1241 = vmax.f32 %v1135, 0.0
        %v1242 = vmax.f32 %v1140, 0.0
        %v1243 = vmax.f32 %v1143, 0.0
        %v1244 = vmax.f32 %v1148, 0.0
        %v1245 = vmax.f32 %v1151, 0.0
        %v1246 = vmax.f32 %v1156, 0.0
        %v1247 = vmax.f32 %v1159, 0.0
        %v1248 = vmax.f32 %v1164, 0.0
        %v1249 = vmax.f32 %v1167, 0.0
        %v1250 = vmax.f32 %v1172, 0.0
        %v1251 = vmax.f32 %v1175, 0.0
        %v1252 = vmax.f32 %v1180, 0.0
        %v1253 = vmax.f32 %v1183, 0.0
        %v1254 = vmax.f32 %v1188, 0.0
        %v1255 = vmax.f32 %v1191, 0.0
        %v1256 = vmax.f32 %v1196, 0.0
        %v1257 = vmax.f32 %v1199, 0.0
        %v1258 = vmax.f32 %v1204, 0.0
        %v1259 = vmax.f32 %v1207, 0.0
        %v1260 = vmax.f32 %v1212, 0.0
        %v1261 = vmax.f32 %v1215, 0.0
        %v1262 = vmax.f32 %v1220, 0.0
        %v1263 = vmax.f32 %v1223, 0.0
        %v1264 = vmax.f32 %v1228, 0.0
        %v1265 = vmax.f32 %v1231, 0.0
        %v1266 = vld [vmem:[%s312] sm:$0xff]
        %v1267 = vpack.c.bf16 %v1235, %v1234
        %v1268 = vpack.c.bf16 %v1237, %v1236
        %v1269 = vpack.c.bf16 %v1239, %v1238
        %v1270 = vpack.c.bf16 %v1241, %v1240
        %v1271 = vpack.c.bf16 %v1243, %v1242
        %v1272 = vpack.c.bf16 %v1245, %v1244
        %v1273 = vpack.c.bf16 %v1247, %v1246
        %v1274 = vpack.c.bf16 %v1249, %v1248
        %v1275 = vpack.c.bf16 %v1251, %v1250
        %v1276 = vpack.c.bf16 %v1253, %v1252
        %v1277 = vpack.c.bf16 %v1255, %v1254
        %v1278 = vpack.c.bf16 %v1257, %v1256
        %v1279 = vpack.c.bf16 %v1259, %v1258
        %v1280 = vpack.c.bf16 %v1261, %v1260
        %v1281 = vpack.c.bf16 %v1263, %v1262
        %v1282 = vpack.c.bf16 %v1265, %v1264
        %v1284 = vunpack.c.l.b16 %v1266
        %v1285 = vunpack.c.h.b16 %v1266
        %v1286 = vpack.c.b16 %v1284, %v1284
        %v1287 = vpack.c.b16 %v1285, %v1285
        %1290 = vmatprep.subr.bf16.mxu0 0
        %1291 = vmatpush1.bf16.msra.mxu0 %v1267
        %1292 = vmatprep.subr.bf16.mxu0 0
        %1293 = vmatpush1.bf16.msra.mxu0 %v1268
        %1294 = vmatprep.subr.bf16.mxu0 0
        %1295 = vmatpush1.bf16.msra.mxu0 %v1269
        %1296 = vmatprep.subr.bf16.mxu0 0
        %1297 = vmatpush1.bf16.msra.mxu0 %v1270
        %1298 = vmatprep.subr.bf16.mxu0 0
        %1299 = vmatpush1.bf16.msra.mxu0 %v1271
        %1300 = vmatprep.subr.bf16.mxu0 0
        %1301 = vmatpush1.bf16.msra.mxu0 %v1272
        %1302 = vmatprep.subr.bf16.mxu0 0
        %1303 = vmatpush1.bf16.msra.mxu0 %v1273
        %1304 = vmatprep.subr.bf16.mxu0 0
        %1305 = vmatpush1.bf16.msra.mxu0 %v1274
        %1306 = vmatprep.subr.bf16.mxu0 0
        %1307 = vmatpush1.bf16.msra.mxu0 %v1275
        %1308 = vmatprep.subr.bf16.mxu0 0
        %1309 = vmatpush1.bf16.msra.mxu0 %v1276
        %1310 = vmatprep.subr.bf16.mxu0 0
        %1311 = vmatpush1.bf16.msra.mxu0 %v1277
        %1312 = vmatprep.subr.bf16.mxu0 0
        %1313 = vmatpush1.bf16.msra.mxu0 %v1278
        %1314 = vmatprep.subr.bf16.mxu0 0
        %1315 = vmatpush1.bf16.msra.mxu0 %v1279
        %1316 = vmatprep.subr.bf16.mxu0 0
        %1317 = vmatpush1.bf16.msra.mxu0 %v1280
        %1318 = vmatprep.subr.bf16.mxu0 0
        %1319 = vmatpush1.bf16.msra.mxu0 %v1281
        %1320 = vmatprep.subr.bf16.mxu0 0
        %1321 = vmatpush1.bf16.msra.mxu0 %v1282
        %1322 = vmatprep.mubr.bf16.mxu0 %v1287
        %1323 = vmatmul.mubr.bf16.gmra.mrb[0].mxu0 %v1286
        %v1324 = vpop.f32.mrb[0].mxu0
        %v1325 = vadd.f32 0.0, %v1324
        %v1326 = vpop.f32.mrb[0].mxu0
        %v1327 = vpop.f32.mrb[0].mxu0
        %v1328 = vpop.f32.mrb[0].mxu0
        %1329 = vdwg.mxu0
        %1330 = vst [vmem:[%s288] sm:$0x1] %v1325
        %s1331 = sand.u32 %s171, 1
        %s1332 = scalar_lea.sflag [#allocation3], %s1331
        %s1333 = sand.u32 %s171, 1
        %s1334 = scalar_lea.vmem [#allocation2], %s1333
        // Predicated region
        $region41: #{tpu_custom_call.1} parent=39 // pred_check
          %p1335 = pneg %p181
        $region42: #{tpu_custom_call.1} parent=39 // pred_check_branch
          %1337 = sbr.rel (%p1335) target = $region44
        $region43: #{tpu_custom_call.1} parent=39 // pred_region
          %s1339 = ssub.s32 16, 16
          %1340 = vsyncadd %s1332, %s1339
          %s1341 = sadd.s32 %s24, %s23
          %s1342 = smul.addr %s1341, 16
          %s1343 = scalar_lea.hbm %s5, %s1342
          %s1345 = sshll.u32 %s1334, 4
          %s1346 = int_to_ptr.vmem [resolvable:$true] %s1345
          %1348 = dma.vmem_to_hbm [thread:$0]  %s1346, 16, %s1343, %s1332
        $region44: #{tpu_custom_call.1} parent=39 // pred_fallthru
          _
      $region40: #{tpu_custom_call.1} parent=5 // pred_fallthru
        _
      %p1349 = scmp.le.s32.totalorder 2, %s14
      // Predicated region
      $region45: #{tpu_custom_call.1} parent=5 // pred_check
        %p1350 = pneg %p1349
      $region46: #{tpu_custom_call.1} parent=5 // pred_check_branch
        %1352 = sbr.rel (%p1350) target = $region48
      $region47: #{tpu_custom_call.1} parent=5 // pred_region
        %s1353 = ssub.s32 %s14, 2
        // Predicated region
        $region49: #{tpu_custom_call.1} parent=47 // pred_check
          %p1354 = pneg %p187
        $region50: #{tpu_custom_call.1} parent=47 // pred_check_branch
          %1356 = sbr.rel (%p1354) target = $region52
        $region51: #{tpu_custom_call.1} parent=47 // pred_region
          %s1357 = sand.u32 %s172, 1
          %s1358 = scalar_lea.sflag [#allocation3], %s1357
          %s1359 = sand.u32 %s172, 1
          %s1360 = scalar_lea.vmem [#allocation2], %s1359
          %1361 = dma.done %s1358, 16
        $region52: #{tpu_custom_call.1} parent=47 // pred_fallthru
          _
      $region48: #{tpu_custom_call.1} parent=5 // pred_fallthru
        _
    $region6: #{tpu_custom_call.1} parent=1 // loop_footer
      %s18 = sadd.s32 1, %s14
    $region7: #{tpu_custom_call.1} parent=1 // loop_footer_branch
      %13 = sbr.rel target = $region3
    $region8: #{tpu_custom_call.1} parent=1 // loop_exit
      _
    %1362 = vsyncpa [#allocation3], 1
    %s1363 = scalar_lea.sflag [#allocation3], 1
    %1364 = vsyncpa %s1363, 1

</llo_original>
